<compile_context>
chip_gen: v7x
topology: tpu7x:2x2x1
jax: 0.10.0
libtpu: 0.0.40
codegen_flags: <defaults>
</compile_context>

<pallas_src>
import functools

import jax
import jax.numpy as jnp
from jax.experimental import pallas as pl
from jax.experimental.pallas import tpu as pltpu


def _round_up(x, m):
    return ((x + m - 1) // m) * m


def _gelu_new(x):
    # "gelu_new" / NewGELUActivation used by Phi configs (tanh approximation).
    c = jnp.sqrt(2.0 / jnp.pi).astype(x.dtype)
    return 0.5 * x * (1.0 + jnp.tanh(c * (x + 0.044715 * (x * x * x))))


def phi_mlp_kernel(x_ref, w1_ref, b1_ref, w2_ref, b2_ref, o_ref, acc_ref):
    # x_ref:   (tm, H)   row tile of the flattened hidden_states
    # w1_ref:  (H, ti)   fc1 weight slice (pre-transposed)
    # b1_ref:  (1, ti)   fc1 bias slice
    # w2_ref:  (ti, H)   fc2 weight slice (pre-transposed)
    # b2_ref:  (1, H)    fc2 bias
    # o_ref:   (tm, H)   output tile (written once, on the last k step)
    # acc_ref: (tm, H)   f32 accumulator, resident across the k (= I) axis
    k = pl.program_id(1)

    @pl.when(k == 0)
    def _():
        acc_ref[...] = jnp.zeros_like(acc_ref)

    x = x_ref[...]
    # fc1 partial: (tm, ti) in f32, bias + gelu applied per intermediate slice
    # (gelu is elementwise over the intermediate dim, so slicing I is exact).
    h = jnp.dot(x, w1_ref[...], preferred_element_type=jnp.float32)
    h = h + b1_ref[...].astype(jnp.float32)
    h = _gelu_new(h)
    # fc2 partial-sum into the f32 accumulator.
    acc_ref[...] += jnp.dot(h.astype(w2_ref.dtype), w2_ref[...],
                            preferred_element_type=jnp.float32)

    @pl.when(k == pl.num_programs(1) - 1)
    def _():
        y = acc_ref[...] + b2_ref[...].astype(jnp.float32)
        o_ref[...] = y.astype(o_ref.dtype)


@functools.partial(jax.jit, static_argnames=("tm", "ti"))
def phi_mlp(hidden_states, w1, b1, w2, b2, *, tm=256, ti=1024):
    """hidden_states: (B, S, H); w1: (H, I); b1: (I,); w2: (I, H); b2: (H,)."""
    B, S, H = hidden_states.shape
    I = w1.shape[1]
    M = B * S

    x2d = hidden_states.reshape(M, H)
    b1_2d = b1.reshape(1, I)
    b2_2d = b2.reshape(1, H)

    # Row tile: multiple of 8 (sublanes), capped at the (padded) row count.
    tm = min(tm, _round_up(M, 8))
    tm = _round_up(tm, 8)
    M_pad = _round_up(M, tm)
    if M_pad != M:
        x2d = jnp.pad(x2d, ((0, M_pad - M), (0, 0)))

    # Intermediate tile: multiple of 128 lanes that divides I, else full I.
    ti = min(ti, I)
    if ti != I:
        ti = (ti // 128) * 128
        if ti == 0 or I % ti != 0:
            ti = I

    grid = (M_pad // tm, I // ti)

    # Advisory cost estimate for XLA scheduling around the custom call.
    def _nbytes(a):
        return a.size * a.dtype.itemsize
    cost = pl.CostEstimate(
        flops=4 * M_pad * H * I,
        transcendentals=M_pad * I,
        bytes_accessed=_nbytes(x2d) + _nbytes(w1) + _nbytes(b1_2d)
        + _nbytes(w2) + _nbytes(b2_2d) + M_pad * H * x2d.dtype.itemsize,
    )

    out2d = pl.pallas_call(
        phi_mlp_kernel,
        out_shape=jax.ShapeDtypeStruct((M_pad, H), hidden_states.dtype),
        grid_spec=pltpu.PrefetchScalarGridSpec(
            num_scalar_prefetch=0,
            grid=grid,
            in_specs=[
                pl.BlockSpec((tm, H), lambda i, k: (i, 0)),   # x row tile
                pl.BlockSpec((H, ti), lambda i, k: (0, k)),   # fc1 weight slice
                pl.BlockSpec((1, ti), lambda i, k: (0, k)),   # fc1 bias slice
                pl.BlockSpec((ti, H), lambda i, k: (k, 0)),   # fc2 weight slice
                pl.BlockSpec((1, H), lambda i, k: (0, 0)),    # fc2 bias
            ],
            out_specs=pl.BlockSpec((tm, H), lambda i, k: (i, 0)),
            scratch_shapes=[pltpu.VMEM((tm, H), jnp.float32)],
        ),
        compiler_params=pltpu.CompilerParams(
            dimension_semantics=("parallel", "arbitrary"),
            vmem_limit_bytes=64 * 1024 * 1024,
        ),
        cost_estimate=cost,
    )(x2d, w1, b1_2d, w2, b2_2d)

    return out2d[:M].reshape(B, S, H)


def _reference(hidden_states, w1, b1, w2, b2):
    h = jnp.dot(hidden_states.astype(jnp.float32), w1.astype(jnp.float32))
    h = h + b1.astype(jnp.float32)
    h = _gelu_new(h)
    return jnp.dot(h, w2.astype(jnp.float32)) + b2.astype(jnp.float32)


if __name__ == "__main__":
    # Small, deterministic synthetic config: hidden_size=32, intermediate=256.
    batch, seq, hidden, inter = 2, 8, 32, 256

    key = jax.random.PRNGKey(0)
    kx, k1, k2, k3, k4 = jax.random.split(key, 5)

    x = jax.random.normal(kx, (batch, seq, hidden), dtype=jnp.float32)
    # nn.Linear(hidden, inter).weight has shape (inter, hidden); we store its
    # transpose (hidden, inter) so the kernel does x @ W1 directly.
    w1 = jax.random.normal(k1, (hidden, inter), dtype=jnp.float32) * 0.05
    b1 = jax.random.normal(k2, (inter,), dtype=jnp.float32) * 0.01
    w2 = jax.random.normal(k3, (inter, hidden), dtype=jnp.float32) * 0.05
    b2 = jax.random.normal(k4, (hidden,), dtype=jnp.float32) * 0.01

    # f32 correctness check; tm=8, ti=128 so both grid axes (row tiling and the
    # intermediate-dimension reduction with accumulator init/finalize) are
    # exercised at this toy size.
    out = phi_mlp(x, w1, b1, w2, b2, tm=8, ti=128)
    jax.block_until_ready(out)
    ref = _reference(x, w1, b1, w2, b2)
    assert out.shape == (batch, seq, hidden)
    assert jnp.allclose(out, ref, atol=1e-5, rtol=1e-5), "f32 mismatch vs reference"

    # bf16 path (the production configuration: halves weight DMA bytes and
    # uses the MXU's bf16 throughput) with the default large-shape tiling
    # parameters; tolerance reflects bf16 rounding of inputs/outputs.
    xb, w1b, b1b = x.astype(jnp.bfloat16), w1.astype(jnp.bfloat16), b1.astype(jnp.bfloat16)
    w2b, b2b = w2.astype(jnp.bfloat16), b2.astype(jnp.bfloat16)
    out_bf16 = phi_mlp(xb, w1b, b1b, w2b, b2b)
    jax.block_until_ready(out_bf16)
    ref_bf16 = _reference(xb, w1b, b1b, w2b, b2b)
    assert jnp.allclose(out_bf16.astype(jnp.float32), ref_bf16,
                        atol=5e-2, rtol=5e-2), "bf16 mismatch vs reference"

    print("KERNEL_OK")
</pallas_src>

<mosaic_0001>
module attributes {stable_mosaic.version = 11 : i64} {
  func.func @phi_mlp_kernel(%arg0: i32, %arg1: i32, %arg2: memref<8x32xf32, #tpu.memory_space<vmem>>, %arg3: memref<32x128xf32, #tpu.memory_space<vmem>>, %arg4: memref<1x128xf32, #tpu.memory_space<vmem>>, %arg5: memref<128x32xf32, #tpu.memory_space<vmem>>, %arg6: memref<1x32xf32, #tpu.memory_space<vmem>>, %arg7: memref<8x32xf32, #tpu.memory_space<vmem>>, %arg8: memref<8x32xf32, #tpu.memory_space<vmem>>) attributes {dimension_semantics = [#tpu.dimension_semantics<parallel>, #tpu.dimension_semantics<arbitrary>], iteration_bounds = array<i64: 2, 2>, scalar_prefetch = 0 : i64, scratch_operands = 1 : i64, tpu.core_type = #tpu.core_type<tc>, window_params = [{transform_indices = @transform_0, window_bounds = array<i64: 8, 32>}, {transform_indices = @transform_1, window_bounds = array<i64: 32, 128>}, {transform_indices = @transform_2, window_bounds = array<i64: 1, 128>}, {transform_indices = @transform_3, window_bounds = array<i64: 128, 32>}, {pipeline_mode = #tpu.pipeline_mode<synchronous>, transform_indices = @transform_4, window_bounds = array<i64: 1, 32>}, {transform_indices = @transform_5, window_bounds = array<i64: 8, 32>}]} {
    %c0_i32 = arith.constant 0 : i32
    %0 = arith.cmpi eq, %arg1, %c0_i32 : i32
    %1 = arith.extui %0 : i1 to i32
    %c0_i32_0 = arith.constant 0 : i32
    %2 = arith.cmpi ne, %1, %c0_i32_0 : i32
    scf.if %2 {
      %cst_18 = arith.constant 0.000000e+00 : f32
      %31 = vector.broadcast %cst_18 : f32 to vector<8x32xf32>
      %c0_19 = arith.constant 0 : index
      %c0_20 = arith.constant 0 : index
      %32 = vector.load %arg8[%c0_19, %c0_20] : memref<8x32xf32, #tpu.memory_space<vmem>>, vector<8x32xf32>
      tpu.vector_store %arg8[%c0_19, %c0_20], %31 {strides = array<i32>} : memref<8x32xf32, #tpu.memory_space<vmem>>, vector<8x32xf32>,
    } else {
    }
    %c0 = arith.constant 0 : index
    %c0_1 = arith.constant 0 : index
    %3 = vector.load %arg2[%c0, %c0_1] : memref<8x32xf32, #tpu.memory_space<vmem>>, vector<8x32xf32>
    %c0_2 = arith.constant 0 : index
    %c0_3 = arith.constant 0 : index
    %4 = vector.load %arg3[%c0_2, %c0_3] : memref<32x128xf32, #tpu.memory_space<vmem>>, vector<32x128xf32>
    %cst = arith.constant dense<0.000000e+00> : vector<8x128xf32>
    %5 = tpu.matmul %3, %4, %cst {dimension_numbers = #tpu.dot_dimension_numbers<[1], [0], [0], [1], [0, 0, 1, 1], [], []>} : vector<8x32xf32>, vector<32x128xf32>, vector<8x128xf32> -> vector<8x128xf32>
    %c0_4 = arith.constant 0 : index
    %c0_5 = arith.constant 0 : index
    %6 = vector.load %arg4[%c0_4, %c0_5] : memref<1x128xf32, #tpu.memory_space<vmem>>, vector<1x128xf32>
    %7 = vector.broadcast %6 : vector<1x128xf32> to vector<8x128xf32>
    %8 = arith.addf %5, %7 : vector<8x128xf32>
    %cst_6 = arith.constant 0.636619746 : f32
    %9 = math.sqrt %cst_6 : f32
    %cst_7 = arith.constant 5.000000e-01 : f32
    %10 = vector.broadcast %cst_7 : f32 to vector<8x128xf32>
    %11 = arith.mulf %10, %8 : vector<8x128xf32>
    %12 = arith.mulf %8, %8 : vector<8x128xf32>
    %13 = arith.mulf %12, %8 : vector<8x128xf32>
    %cst_8 = arith.constant 4.471500e-02 : f32
    %14 = vector.broadcast %cst_8 : f32 to vector<8x128xf32>
    %15 = arith.mulf %14, %13 : vector<8x128xf32>
    %16 = arith.addf %8, %15 : vector<8x128xf32>
    %17 = vector.broadcast %9 : f32 to vector<8x128xf32>
    %18 = arith.mulf %17, %16 : vector<8x128xf32>
    %19 = math.tanh %18 : vector<8x128xf32>
    %cst_9 = arith.constant 1.000000e+00 : f32
    %20 = vector.broadcast %cst_9 : f32 to vector<8x128xf32>
    %21 = arith.addf %20, %19 : vector<8x128xf32>
    %22 = arith.mulf %11, %21 : vector<8x128xf32>
    %c0_10 = arith.constant 0 : index
    %c0_11 = arith.constant 0 : index
    %23 = vector.load %arg8[%c0_10, %c0_11] : memref<8x32xf32, #tpu.memory_space<vmem>>, vector<8x32xf32>
    %c0_12 = arith.constant 0 : index
    %c0_13 = arith.constant 0 : index
    %24 = vector.load %arg5[%c0_12, %c0_13] : memref<128x32xf32, #tpu.memory_space<vmem>>, vector<128x32xf32>
    %cst_14 = arith.constant dense<0.000000e+00> : vector<8x32xf32>
    %25 = tpu.matmul %22, %24, %cst_14 {dimension_numbers = #tpu.dot_dimension_numbers<[1], [0], [0], [1], [0, 0, 1, 1], [], []>} : vector<8x128xf32>, vector<128x32xf32>, vector<8x32xf32> -> vector<8x32xf32>
    %26 = arith.addf %23, %25 : vector<8x32xf32>
    %c0_15 = arith.constant 0 : index
    %c0_16 = arith.constant 0 : index
    %27 = vector.load %arg8[%c0_15, %c0_16] : memref<8x32xf32, #tpu.memory_space<vmem>>, vector<8x32xf32>
    tpu.vector_store %arg8[%c0_15, %c0_16], %26 {strides = array<i32>} : memref<8x32xf32, #tpu.memory_space<vmem>>, vector<8x32xf32>,
    %c1_i32 = arith.constant 1 : i32
    %28 = arith.cmpi eq, %arg1, %c1_i32 : i32
    %29 = arith.extui %28 : i1 to i32
    %c0_i32_17 = arith.constant 0 : i32
    %30 = arith.cmpi ne, %29, %c0_i32_17 : i32
    scf.if %30 {
      %c0_18 = arith.constant 0 : index
      %c0_19 = arith.constant 0 : index
      %31 = vector.load %arg8[%c0_18, %c0_19] : memref<8x32xf32, #tpu.memory_space<vmem>>, vector<8x32xf32>
      %c0_20 = arith.constant 0 : index
      %c0_21 = arith.constant 0 : index
      %32 = vector.load %arg6[%c0_20, %c0_21] : memref<1x32xf32, #tpu.memory_space<vmem>>, vector<1x32xf32>
      %33 = vector.broadcast %32 : vector<1x32xf32> to vector<8x32xf32>
      %34 = arith.addf %31, %33 : vector<8x32xf32>
      %c0_22 = arith.constant 0 : index
      %c0_23 = arith.constant 0 : index
      %35 = vector.load %arg7[%c0_22, %c0_23] : memref<8x32xf32, #tpu.memory_space<vmem>>, vector<8x32xf32>
      tpu.vector_store %arg7[%c0_22, %c0_23], %34 {strides = array<i32>} : memref<8x32xf32, #tpu.memory_space<vmem>>, vector<8x32xf32>,
    } else {
    }
    return
  }
  func.func @transform_0(%arg0: i32, %arg1: i32) -> (i32, i32) {
    %c0_i32 = arith.constant 0 : i32
    %c0_i32_0 = arith.constant 0 : i32
    return %arg0, %c0_i32 : i32, i32
  }
  func.func @transform_1(%arg0: i32, %arg1: i32) -> (i32, i32) {
    %c0_i32 = arith.constant 0 : i32
    %c0_i32_0 = arith.constant 0 : i32
    return %c0_i32, %arg1 : i32, i32
  }
  func.func @transform_2(%arg0: i32, %arg1: i32) -> (i32, i32) {
    %c0_i32 = arith.constant 0 : i32
    %c0_i32_0 = arith.constant 0 : i32
    return %c0_i32, %arg1 : i32, i32
  }
  func.func @transform_3(%arg0: i32, %arg1: i32) -> (i32, i32) {
    %c0_i32 = arith.constant 0 : i32
    %c0_i32_0 = arith.constant 0 : i32
    return %arg1, %c0_i32 : i32, i32
  }
  func.func @transform_4(%arg0: i32, %arg1: i32) -> (i32, i32) {
    %c0_i32 = arith.constant 0 : i32
    %c0_i32_0 = arith.constant 0 : i32
    %c0_i32_1 = arith.constant 0 : i32
    return %c0_i32, %c0_i32_0 : i32, i32
  }
  func.func @transform_5(%arg0: i32, %arg1: i32) -> (i32, i32) {
    %c0_i32 = arith.constant 0 : i32
    %c0_i32_0 = arith.constant 0 : i32
    return %arg0, %c0_i32 : i32, i32
  }
}

</mosaic_0001>

<llo_original>
// kernel: phi_mlp.1
$region0: #{phi_mlp.1}
  #allocation0 [shape = 'u32[]', space=smem, size = 0x4, offset = 0x4, fixed_abs, tag = 'smem constant byte address 0x4 - core index']
  #allocation1 [shape = 'u32[144,128]{1,0:T(1,128)}', space=vmem, size = 0x12000, scoped, tag = 'internal scratch']
  #allocation2 [shape = 'f32[8,32]{1,0:T(8,128)}', space=vmem, size = 0x1000, scoped, tag = 'scratch operand']
  %s0 = inlined_call_operand.hbm [shape: f32[16,32], index: 0, kind: input, shape index: {}]
  %s1 = inlined_call_operand.hbm [shape: f32[32,256], index: 1, kind: input, shape index: {}]
  %s2 = inlined_call_operand.hbm [shape: f32[1,256], index: 2, kind: input, shape index: {}]
  %s3 = inlined_call_operand.hbm [shape: f32[256,32], index: 3, kind: input, shape index: {}]
  %s4 = inlined_call_operand.hbm [shape: f32[1,32], index: 4, kind: input, shape index: {}]
  %s5 = inlined_call_operand.hbm [shape: f32[16,32], index: 5, kind: output, shape index: {}]
  %s6 = sld [smem:[#allocation0]]
  $region81: #{phi_mlp.1} parent=0
    _
  %s8 = ssub.s32 1, %s6
  %s9 = scalar_select 0, %s8, %s6
  $region1: #{phi_mlp.1} parent=0
    #allocation3 [shape = 'u8[8192]{0}', space=vmem, size = 0x2000, scoped, tag = 'input window, operand 0']
    #allocation4 [shape = 's32[2]{0}', space=sflag, size = 0x8, scoped, tag = 'scoped memory for phi_mlp.1']
    #allocation5 [shape = 's32[2]{0}', space=sflag, size = 0x8, scoped, tag = 'scoped memory for phi_mlp.1']
    #allocation6 [shape = 'u8[32768]{0}', space=vmem, size = 0x8000, scoped, tag = 'input window, operand 1']
    #allocation7 [shape = 's32[2]{0}', space=sflag, size = 0x8, scoped, tag = 'scoped memory for phi_mlp.1']
    #allocation8 [shape = 'u8[1024]{0}', space=vmem, size = 0x400, scoped, tag = 'input window, operand 2']
    #allocation9 [shape = 'u8[131072]{0}', space=vmem, size = 0x20000, scoped, tag = 'input window, operand 3']
    #allocation10 [shape = 's32[2]{0}', space=sflag, size = 0x8, scoped, tag = 'scoped memory for phi_mlp.1']
    #allocation11 [shape = 'u8[512]{0}', space=vmem, size = 0x400, scoped, tag = 'input window, operand 4, single buffered']
    #allocation12 [shape = 'u8[8192]{0}', space=vmem, size = 0x2000, scoped, tag = 'output window, operand 0']
    %10 = vsyncpa [#allocation4], 0
    %s11 = scalar_lea.sflag [#allocation4], 1
    %12 = vsyncpa %s11, 0
    %13 = vsyncpa [#allocation7], 0
    %s14 = scalar_lea.sflag [#allocation7], 1
    %15 = vsyncpa %s14, 0
    %16 = vsyncpa [#allocation10], 0
    %s17 = scalar_lea.sflag [#allocation10], 1
    %18 = vsyncpa %s17, 0
    %19 = vsyncpa [#allocation5], 0
    %s20 = scalar_lea.sflag [#allocation5], 1
    %21 = vsyncpa %s20, 0
    loop: start=0, step=1, limit=6
    $region2: #{phi_mlp.1} parent=1 // loop_pre_header
      _
    $region3: #{phi_mlp.1} parent=1 // loop_header
      %s23 = sphi 0, %s27
      %p24 = scmp.ge.s32.totalorder %s23, 6
      %s30 = sphi 0, %s42
      %s31 = sphi 0, %s38
      %s32 = sphi 0, %s30
      %s33 = sphi 0, %s31
      %s34 = sphi 0, %s32
      %s35 = sphi 0, %s33
      %s45 = sphi 0, %s47
      %s48 = sphi 0, %s45
      %s49 = sphi 0, %s48
      %s65 = sphi 0, %s49
      %s71 = sphi 0, %s73
      %s74 = sphi 0, %s71
      %s75 = sphi 0, %s74
      %s91 = sphi 0, %s75
      %s97 = sphi 0, %s99
      %s100 = sphi 0, %s97
      %s101 = sphi 0, %s100
      %s117 = sphi 0, %s101
      %s123 = sphi 0, %s125
      %s126 = sphi 0, %s123
      %s127 = sphi 0, %s126
      %s143 = sphi 0, %s127
      %s147 = sphi 0, %s147
      %s149 = sphi 0, %s147
      %s150 = sphi 0, %s149
      %s164 = sphi 0, %s150
      %s170 = sphi 0, %s172
      %s173 = sphi 0, %s170
      %s174 = sphi 0, %s173
      %s190 = sphi 0, %s174
    $region4: #{phi_mlp.1} parent=1 // loop_header_branch
      %26 = sbr.rel (%p24) target = $region8
    $region5: #{phi_mlp.1} parent=1 // loop_body
      %s28 = ssub.s32 %s23, 1
      %s29 = ssub.s32 %s23, 2
      %s36 = sadd.s32 1, %s31
      %p37 = scmp.ge.s32.totalorder %s36, 2
      %s38 = scalar_select %p37, 0, %s36
      %s39 = sadd.s32 1, %s30
      %s40 = scalar_select %p37, %s39, %s30
      %p41 = scmp.ge.s32.totalorder %s40, 2
      %s42 = scalar_select %p41, 0, %s40
      %s43 = ssub.s32 %s30, %s42
      %p44 = scmp.eq.s32.totalorder %s43, 0
      %s46 = sadd.s32 %s45, 1
      %s47 = scalar_select %p44, %s45, %s46
      %p50 = pneg %p44
      %p51 = scmp.eq.s32.totalorder %s23, 3
      %p52 = por %p50, %p51
      %p53 = scmp.ne.s32.totalorder %s45, %s48
      %p54 = scmp.eq.s32.totalorder %s23, 0
      %p55 = por %p53, %p54
      %p56 = scmp.ne.s32.totalorder %s45, %s48
      %p57 = scmp.eq.s32.totalorder %s28, 3
      %p58 = por %p56, %p57
      %p59 = scmp.ne.s32.totalorder %s48, %s49
      %p60 = scmp.eq.s32.totalorder %s28, 0
      %p61 = por %p59, %p60
      %p62 = scmp.ne.s32.totalorder %s48, %s49
      %p63 = scmp.eq.s32.totalorder %s29, 3
      %p64 = por %p62, %p63
      %p66 = scmp.ne.s32.totalorder %s49, %s65
      %p67 = scmp.eq.s32.totalorder %s29, 0
      %p68 = por %p66, %p67
      %s69 = ssub.s32 %s31, %s38
      %p70 = scmp.eq.s32.totalorder %s69, 0
      %s72 = sadd.s32 %s71, 1
      %s73 = scalar_select %p70, %s71, %s72
      %p76 = pneg %p70
      %p77 = scmp.eq.s32.totalorder %s23, 3
      %p78 = por %p76, %p77
      %p79 = scmp.ne.s32.totalorder %s71, %s74
      %p80 = scmp.eq.s32.totalorder %s23, 0
      %p81 = por %p79, %p80
      %p82 = scmp.ne.s32.totalorder %s71, %s74
      %p83 = scmp.eq.s32.totalorder %s28, 3
      %p84 = por %p82, %p83
      %p85 = scmp.ne.s32.totalorder %s74, %s75
      %p86 = scmp.eq.s32.totalorder %s28, 0
      %p87 = por %p85, %p86
      %p88 = scmp.ne.s32.totalorder %s74, %s75
      %p89 = scmp.eq.s32.totalorder %s29, 3
      %p90 = por %p88, %p89
      %p92 = scmp.ne.s32.totalorder %s75, %s91
      %p93 = scmp.eq.s32.totalorder %s29, 0
      %p94 = por %p92, %p93
      %s95 = ssub.s32 %s31, %s38
      %p96 = scmp.eq.s32.totalorder %s95, 0
      %s98 = sadd.s32 %s97, 1
      %s99 = scalar_select %p96, %s97, %s98
      %p102 = pneg %p96
      %p103 = scmp.eq.s32.totalorder %s23, 3
      %p104 = por %p102, %p103
      %p105 = scmp.ne.s32.totalorder %s97, %s100
      %p106 = scmp.eq.s32.totalorder %s23, 0
      %p107 = por %p105, %p106
      %p108 = scmp.ne.s32.totalorder %s97, %s100
      %p109 = scmp.eq.s32.totalorder %s28, 3
      %p110 = por %p108, %p109
      %p111 = scmp.ne.s32.totalorder %s100, %s101
      %p112 = scmp.eq.s32.totalorder %s28, 0
      %p113 = por %p111, %p112
      %p114 = scmp.ne.s32.totalorder %s100, %s101
      %p115 = scmp.eq.s32.totalorder %s29, 3
      %p116 = por %p114, %p115
      %p118 = scmp.ne.s32.totalorder %s101, %s117
      %p119 = scmp.eq.s32.totalorder %s29, 0
      %p120 = por %p118, %p119
      %s121 = ssub.s32 %s31, %s38
      %p122 = scmp.eq.s32.totalorder %s121, 0
      %s124 = sadd.s32 %s123, 1
      %s125 = scalar_select %p122, %s123, %s124
      %p128 = pneg %p122
      %p129 = scmp.eq.s32.totalorder %s23, 3
      %p130 = por %p128, %p129
      %p131 = scmp.ne.s32.totalorder %s123, %s126
      %p132 = scmp.eq.s32.totalorder %s23, 0
      %p133 = por %p131, %p132
      %p134 = scmp.ne.s32.totalorder %s123, %s126
      %p135 = scmp.eq.s32.totalorder %s28, 3
      %p136 = por %p134, %p135
      %p137 = scmp.ne.s32.totalorder %s126, %s127
      %p138 = scmp.eq.s32.totalorder %s28, 0
      %p139 = por %p137, %p138
      %p140 = scmp.ne.s32.totalorder %s126, %s127
      %p141 = scmp.eq.s32.totalorder %s29, 3
      %p142 = por %p140, %p141
      %p144 = scmp.ne.s32.totalorder %s127, %s143
      %p145 = scmp.eq.s32.totalorder %s29, 0
      %p146 = por %p144, %p145
      %s148 = sadd.s32 %s147, 1
      %p151 = scmp.eq.s32.totalorder %s23, 3
      %p152 = scmp.ne.s32.totalorder %s147, %s149
      %p153 = scmp.eq.s32.totalorder %s23, 0
      %p154 = por %p152, %p153
      %p155 = scmp.ne.s32.totalorder %s147, %s149
      %p156 = scmp.eq.s32.totalorder %s28, 3
      %p157 = por %p155, %p156
      %p158 = scmp.ne.s32.totalorder %s149, %s150
      %p159 = scmp.eq.s32.totalorder %s28, 0
      %p160 = por %p158, %p159
      %p161 = scmp.ne.s32.totalorder %s149, %s150
      %p162 = scmp.eq.s32.totalorder %s29, 3
      %p163 = por %p161, %p162
      %p165 = scmp.ne.s32.totalorder %s150, %s164
      %p166 = scmp.eq.s32.totalorder %s29, 0
      %p167 = por %p165, %p166
      %s168 = ssub.s32 %s30, %s42
      %p169 = scmp.eq.s32.totalorder %s168, 0
      %s171 = sadd.s32 %s170, 1
      %s172 = scalar_select %p169, %s170, %s171
      %p175 = pneg %p169
      %p176 = scmp.eq.s32.totalorder %s23, 3
      %p177 = por %p175, %p176
      %p178 = scmp.ne.s32.totalorder %s170, %s173
      %p179 = scmp.eq.s32.totalorder %s23, 0
      %p180 = por %p178, %p179
      %p181 = scmp.ne.s32.totalorder %s170, %s173
      %p182 = scmp.eq.s32.totalorder %s28, 3
      %p183 = por %p181, %p182
      %p184 = scmp.ne.s32.totalorder %s173, %s174
      %p185 = scmp.eq.s32.totalorder %s28, 0
      %p186 = por %p184, %p185
      %p187 = scmp.ne.s32.totalorder %s173, %s174
      %p188 = scmp.eq.s32.totalorder %s29, 3
      %p189 = por %p187, %p188
      %p191 = scmp.ne.s32.totalorder %s174, %s190
      %p192 = scmp.eq.s32.totalorder %s29, 0
      %p193 = por %p191, %p192
      %p194 = scmp.le.s32.totalorder 1, %s23
      %p195 = scmp.lt.s32.totalorder %s23, 5
      %p196 = pnand %p194, %p195
      %p197 = pneg %p196
      // Predicated region
      $region9: #{phi_mlp.1} parent=5 // pred_check
        _
      $region10: #{phi_mlp.1} parent=5 // pred_check_branch
        %199 = sbr.rel (%p196) target = $region12
      $region11: #{phi_mlp.1} parent=5 // pred_region
        %s200 = ssub.s32 %s23, 1
        // Predicated region
        $region13: #{phi_mlp.1} parent=11 // pred_check
          %p201 = pneg %p160
        $region14: #{phi_mlp.1} parent=11 // pred_check_branch
          %203 = sbr.rel (%p201) target = $region16
        $region15: #{phi_mlp.1} parent=11 // pred_region
          %s205 = ssub.s32 16, 16
          %206 = vsyncadd [#allocation10], %s205
          %s208 = sshll.u32 [#allocation11], 4
          %s209 = int_to_ptr.vmem [resolvable:$true] %s208
          %211 = dma.hbm_to_vmem [thread:$0]  %s4, 16, %s209, [#allocation10]
        $region16: #{phi_mlp.1} parent=11 // pred_fallthru
          _
      $region12: #{phi_mlp.1} parent=5 // pred_fallthru
        _
      %p212 = scmp.lt.s32.totalorder %s23, 4
      // Predicated region
      $region17: #{phi_mlp.1} parent=5 // pred_check
        %p213 = pneg %p212
      $region18: #{phi_mlp.1} parent=5 // pred_check_branch
        %215 = sbr.rel (%p213) target = $region20
      $region19: #{phi_mlp.1} parent=5 // pred_region
        // Predicated region
        $region21: #{phi_mlp.1} parent=19 // pred_check
          %p216 = pneg %p55
        $region22: #{phi_mlp.1} parent=19 // pred_check_branch
          %218 = sbr.rel (%p216) target = $region24
        $region23: #{phi_mlp.1} parent=19 // pred_region
          %s219 = sand.u32 %s45, 1
          %s220 = scalar_lea.sflag [#allocation4], %s219
          %s221 = sand.u32 %s45, 1
          %s222 = smul.addr %s221, 8
          %s223 = scalar_lea.vmem [#allocation3], %s222
          %s225 = ssub.s32 128, 128
          %226 = vsyncadd %s220, %s225
          %s227 = smul.addr %s30, 128
          %s228 = scalar_lea.hbm %s0, %s227
          %s230 = sshll.u32 %s223, 4
          %s231 = int_to_ptr.vmem [resolvable:$true] %s230
          %233 = dma.hbm_to_vmem [thread:$0]  %s228, 128, %s231, %s220
        $region24: #{phi_mlp.1} parent=19 // pred_fallthru
          _
        // Predicated region
        $region25: #{phi_mlp.1} parent=19 // pred_check
          %p234 = pneg %p81
        $region26: #{phi_mlp.1} parent=19 // pred_check_branch
          %236 = sbr.rel (%p234) target = $region28
        $region27: #{phi_mlp.1} parent=19 // pred_region
          %s237 = sand.u32 %s23, 1
          %s238 = scalar_lea.sflag [#allocation7], %s237
          %s239 = sand.u32 %s71, 1
          %s240 = smul.addr %s239, 32
          %s241 = scalar_lea.vmem [#allocation6], %s240
          %s243 = ssub.s32 512, 512
          %244 = vsyncadd %s238, %s243
          %s245 = smul.addr %s31, 128
          %s246 = scalar_lea.hbm %s1, %s245
          %s247 = sshll.u32 %s241, 4
          %s248 = int_to_ptr.vmem [resolvable:$true] %s247
          %253 = dma.hbm_to_vmem [thread:$0]  %s246, 512, %s248, %s238, 256, 128, 8
        $region28: #{phi_mlp.1} parent=19 // pred_fallthru
          _
        // Predicated region
        $region29: #{phi_mlp.1} parent=19 // pred_check
          %p254 = pneg %p107
        $region30: #{phi_mlp.1} parent=19 // pred_check_branch
          %256 = sbr.rel (%p254) target = $region32
        $region31: #{phi_mlp.1} parent=19 // pred_region
          %s257 = sand.u32 %s23, 1
          %s258 = scalar_lea.sflag [#allocation7], %s257
          %s259 = sand.u32 %s97, 1
          %s260 = scalar_lea.vmem [#allocation8], %s259
          %s262 = ssub.s32 16, 16
          %263 = vsyncadd %s258, %s262
          %s264 = smul.addr %s31, 16
          %s265 = scalar_lea.hbm %s2, %s264
          %s267 = sshll.u32 %s260, 4
          %s268 = int_to_ptr.vmem [resolvable:$true] %s267
          %270 = dma.hbm_to_vmem [thread:$0]  %s265, 16, %s268, %s258
        $region32: #{phi_mlp.1} parent=19 // pred_fallthru
          _
        // Predicated region
        $region33: #{phi_mlp.1} parent=19 // pred_check
          %p271 = pneg %p133
        $region34: #{phi_mlp.1} parent=19 // pred_check_branch
          %273 = sbr.rel (%p271) target = $region36
        $region35: #{phi_mlp.1} parent=19 // pred_region
          %s274 = sand.u32 %s23, 1
          %s275 = scalar_lea.sflag [#allocation10], %s274
          %s276 = sand.u32 %s123, 1
          %s277 = smul.addr %s276, 128
          %s278 = scalar_lea.vmem [#allocation9], %s277
          %s279 = smul.u32 16, %s31
          %s281 = ssub.s32 2048, 2048
          %282 = vsyncadd %s275, %s281
          %s283 = smul.addr %s279, 128
          %s284 = scalar_lea.hbm %s3, %s283
          %s285 = sshll.u32 %s278, 4
          %s286 = int_to_ptr.vmem [resolvable:$true] %s285
          %291 = dma.hbm_to_vmem [thread:$0]  %s284, 2048, %s286, %s275, 128, 128, 8
        $region36: #{phi_mlp.1} parent=19 // pred_fallthru
          _
      $region20: #{phi_mlp.1} parent=5 // pred_fallthru
        _
      %p292 = scmp.le.s32.totalorder 1, %s23
      %p293 = scmp.lt.s32.totalorder %s23, 5
      %p294 = pnand %p292, %p293
      %p295 = pneg %p294
      // Predicated region
      $region37: #{phi_mlp.1} parent=5 // pred_check
        _
      $region38: #{phi_mlp.1} parent=5 // pred_check_branch
        %297 = sbr.rel (%p294) target = $region40
      $region39: #{phi_mlp.1} parent=5 // pred_region
        %s298 = ssub.s32 %s23, 1
        %s299 = sand.u32 %s48, 1
        %s300 = scalar_lea.sflag [#allocation4], %s299
        %s301 = sand.u32 %s48, 1
        %s302 = smul.addr %s301, 8
        %s303 = scalar_lea.vmem [#allocation3], %s302
        // Predicated region
        $region41: #{phi_mlp.1} parent=39 // pred_check
          %p304 = pneg %p61
        $region42: #{phi_mlp.1} parent=39 // pred_check_branch
          %306 = sbr.rel (%p304) target = $region44
        $region43: #{phi_mlp.1} parent=39 // pred_region
          %307 = dma.done %s300, 128
        $region44: #{phi_mlp.1} parent=39 // pred_fallthru
          _
        %s308 = sand.u32 %s28, 1
        %s309 = scalar_lea.sflag [#allocation7], %s308
        %s310 = sand.u32 %s74, 1
        %s311 = smul.addr %s310, 32
        %s312 = scalar_lea.vmem [#allocation6], %s311
        // Predicated region
        $region45: #{phi_mlp.1} parent=39 // pred_check
          %p313 = pneg %p87
        $region46: #{phi_mlp.1} parent=39 // pred_check_branch
          %315 = sbr.rel (%p313) target = $region48
        $region47: #{phi_mlp.1} parent=39 // pred_region
          %316 = dma.done %s309, 512
        $region48: #{phi_mlp.1} parent=39 // pred_fallthru
          _
        %s317 = sand.u32 %s28, 1
        %s318 = scalar_lea.sflag [#allocation7], %s317
        %s319 = sand.u32 %s100, 1
        %s320 = scalar_lea.vmem [#allocation8], %s319
        // Predicated region
        $region49: #{phi_mlp.1} parent=39 // pred_check
          %p321 = pneg %p113
        $region50: #{phi_mlp.1} parent=39 // pred_check_branch
          %323 = sbr.rel (%p321) target = $region52
        $region51: #{phi_mlp.1} parent=39 // pred_region
          %324 = dma.done %s318, 16
        $region52: #{phi_mlp.1} parent=39 // pred_fallthru
          _
        %s325 = sand.u32 %s28, 1
        %s326 = scalar_lea.sflag [#allocation10], %s325
        %s327 = sand.u32 %s126, 1
        %s328 = smul.addr %s327, 128
        %s329 = scalar_lea.vmem [#allocation9], %s328
        // Predicated region
        $region53: #{phi_mlp.1} parent=39 // pred_check
          %p330 = pneg %p139
        $region54: #{phi_mlp.1} parent=39 // pred_check_branch
          %332 = sbr.rel (%p330) target = $region56
        $region55: #{phi_mlp.1} parent=39 // pred_region
          %333 = dma.done %s326, 2048
        $region56: #{phi_mlp.1} parent=39 // pred_fallthru
          _
        // Predicated region
        $region57: #{phi_mlp.1} parent=39 // pred_check
          %p334 = pneg %p160
        $region58: #{phi_mlp.1} parent=39 // pred_check_branch
          %336 = sbr.rel (%p334) target = $region60
        $region59: #{phi_mlp.1} parent=39 // pred_region
          %337 = dma.done [#allocation10], 16
        $region60: #{phi_mlp.1} parent=39 // pred_fallthru
          _
        %s338 = sand.u32 %s48, 1
        %s339 = scalar_lea.sflag [#allocation4], %s338
        %s340 = sand.u32 %s48, 1
        %s341 = smul.addr %s340, 8
        %s342 = scalar_lea.vmem [#allocation3], %s341
        %p343 = pneg %p61
        %p344 = pneg %p58
        %s345 = sand.u32 %s28, 1
        %s346 = scalar_lea.sflag [#allocation7], %s345
        %s347 = sand.u32 %s74, 1
        %s348 = smul.addr %s347, 32
        %s349 = scalar_lea.vmem [#allocation6], %s348
        %p350 = pneg %p87
        %p351 = pneg %p84
        %s352 = sand.u32 %s28, 1
        %s353 = scalar_lea.sflag [#allocation7], %s352
        %s354 = sand.u32 %s100, 1
        %s355 = scalar_lea.vmem [#allocation8], %s354
        %p356 = pneg %p113
        %p357 = pneg %p110
        %s358 = sand.u32 %s28, 1
        %s359 = scalar_lea.sflag [#allocation10], %s358
        %s360 = sand.u32 %s126, 1
        %s361 = smul.addr %s360, 128
        %s362 = scalar_lea.vmem [#allocation9], %s361
        %p363 = pneg %p139
        %p364 = pneg %p136
        %p365 = pneg %p160
        %p366 = pneg %p157
        %p367 = pneg %p186
        %p368 = pneg %p183
        %s369 = sand.u32 %s173, 1
        %s370 = scalar_lea.sflag [#allocation5], %s369
        %s371 = sand.u32 %s173, 1
        %s372 = smul.addr %s371, 8
        %s373 = scalar_lea.vmem [#allocation12], %s372
        %s374 = smul.u32 16, %s33
        %p375 = scmp.eq.s32.totalorder %s33, 0
        // Predicated region
        $region61: #{phi_mlp.1} parent=39 // pred_check
          %p376 = pneg %p375
        $region62: #{phi_mlp.1} parent=39 // pred_check_branch
          %378 = sbr.rel (%p376) target = $region64
        $region63: #{phi_mlp.1} parent=39 // pred_region
          %vm379 = vcmask 261120
          %380 = vst.msk [vmem:[#allocation2] sm:$0xff] %vm379, 0.0
        $region64: #{phi_mlp.1} parent=39 // pred_fallthru
          _
        %v381 = vld [vmem:[%s303] sm:$0xff]
        %v382 = vld [vmem:[%s312] sm:$0xff]
        %v383 = vld [vmem:[%s312 + $0x8] sm:$0xff]
        %v384 = vld [vmem:[%s312 + $0x10] sm:$0xff]
        %v385 = vld [vmem:[%s312 + $0x18] sm:$0xff]
        %v386 = vld [vmem:[%s320] sm:$0x1]
        %v388 = vlaneseq
        %v389 = vshrl.u32 %v388, 7
        %v390 = vsub.s32 0, %v389
        %v391 = vrot.slane %v386, %v390
        %vm393 = vcmask 261120
        %v395 = vsel %vm393, %v381, 0
        %397 = vmatprep.subr.mxu0 0.0
        %398 = vmatpush1.msra.mxu0 %v382
        %399 = vmatprep.subr.mxu0 0.0
        %400 = vmatpush1.msra.mxu0 %v383
        %401 = vmatprep.subr.mxu0 0.0
        %402 = vmatpush1.msra.mxu0 %v384
        %403 = vmatprep.subr.mxu0 0.0
        %404 = vmatpush1.msra.mxu0 %v385
        %405 = vmatprep.subr.mxu0 0.0
        %406 = vmatpush1.msra.mxu0 0.0
        %407 = vmatprep.subr.mxu0 0.0
        %408 = vmatpush1.msra.mxu0 0.0
        %409 = vmatprep.subr.mxu0 0.0
        %410 = vmatpush1.msra.mxu0 0.0
        %411 = vmatprep.subr.mxu0 0.0
        %412 = vmatpush1.msra.mxu0 0.0
        %413 = vmatprep.subr.mxu0 0.0
        %414 = vmatpush1.msra.mxu0 0.0
        %415 = vmatprep.subr.mxu0 0.0
        %416 = vmatpush1.msra.mxu0 0.0
        %417 = vmatprep.subr.mxu0 0.0
        %418 = vmatpush1.msra.mxu0 0.0
        %419 = vmatprep.subr.mxu0 0.0
        %420 = vmatpush1.msra.mxu0 0.0
        %421 = vmatprep.subr.mxu0 0.0
        %422 = vmatpush1.msra.mxu0 0.0
        %423 = vmatprep.subr.mxu0 0.0
        %424 = vmatpush1.msra.mxu0 0.0
        %425 = vmatprep.subr.mxu0 0.0
        %426 = vmatpush1.msra.mxu0 0.0
        %427 = vmatprep.subr.mxu0 0.0
        %428 = vmatpush1.msra.mxu0 0.0
        %429 = vmatprep.subr.mxu0 0.0
        %430 = vmatpush1.msra.mxu0 0.0
        %431 = vmatprep.subr.mxu0 0.0
        %432 = vmatpush1.msra.mxu0 0.0
        %433 = vmatprep.subr.mxu0 0.0
        %434 = vmatpush1.msra.mxu0 0.0
        %435 = vmatprep.subr.mxu0 0.0
        %436 = vmatpush1.msra.mxu0 0.0
        %437 = vmatprep.subr.mxu0 0.0
        %438 = vmatpush1.msra.mxu0 0.0
        %439 = vmatprep.subr.mxu0 0.0
        %440 = vmatpush1.msra.mxu0 0.0
        %441 = vmatprep.subr.mxu0 0.0
        %442 = vmatpush1.msra.mxu0 0.0
        %443 = vmatprep.subr.mxu0 0.0
        %444 = vmatpush1.msra.mxu0 0.0
        %445 = vmatprep.subr.mxu0 0.0
        %446 = vmatpush1.msra.mxu0 0.0
        %447 = vmatprep.subr.mxu0 0.0
        %448 = vmatpush1.msra.mxu0 0.0
        %449 = vmatprep.subr.mxu0 0.0
        %450 = vmatpush1.msra.mxu0 0.0
        %451 = vmatprep.subr.mxu0 0.0
        %452 = vmatpush1.msra.mxu0 0.0
        %453 = vmatprep.subr.mxu0 0.0
        %454 = vmatpush1.msra.mxu0 0.0
        %455 = vmatprep.subr.mxu0 0.0
        %456 = vmatpush1.msra.mxu0 0.0
        %457 = vmatprep.subr.mxu0 0.0
        %458 = vmatpush1.msra.mxu0 0.0
        %459 = vmatprep.subr.mxu0 0.0
        %460 = vmatpush1.msra.mxu0 0.0
        %461 = vmatprep.mubr.f32.mxu0 0.0
        %462 = vmatmul.mubr.f32.gmra.mrb[0].mxu0 %v395
        %v463 = vpop.f32.mrb[0].mxu0
        %v464 = vadd.f32 %v391, %v463
        %v465 = vpop.f32.mrb[0].mxu0
        %466 = vdwg.mxu0
        %v467 = vmul.f32 %v464, 0.5
        %v468 = vmul.f32 %v464, %v464
        %v469 = vmul.f32 %v468, %v464
        %v470 = vmul.f32 %v469, 0.044715
        %v471 = vadd.f32 %v464, %v470
        %v472 = vmul.f32 %v471, 0.7978845
        %v473 = vtanh.pop %v472
        %v474 = vadd.f32 %v473, 1.0
        %v475 = vmul.f32 %v467, %v474
        %v476 = vld [vmem:[#allocation2] sm:$0xff]
        %v477 = vld [vmem:[%s329] sm:$0xff]
        %v478 = vld [vmem:[%s329 + $0x8] sm:$0xff]
        %v479 = vld [vmem:[%s329 + $0x10] sm:$0xff]
        %v480 = vld [vmem:[%s329 + $0x18] sm:$0xff]
        %v481 = vld [vmem:[%s329 + $0x20] sm:$0xff]
        %v482 = vld [vmem:[%s329 + $0x28] sm:$0xff]
        %v483 = vld [vmem:[%s329 + $0x30] sm:$0xff]
        %v484 = vld [vmem:[%s329 + $0x38] sm:$0xff]
        %v485 = vld [vmem:[%s329 + $0x40] sm:$0xff]
        %v486 = vld [vmem:[%s329 + $0x48] sm:$0xff]
        %v487 = vld [vmem:[%s329 + $0x50] sm:$0xff]
        %v488 = vld [vmem:[%s329 + $0x58] sm:$0xff]
        %v489 = vld [vmem:[%s329 + $0x60] sm:$0xff]
        %v490 = vld [vmem:[%s329 + $0x68] sm:$0xff]
        %v491 = vld [vmem:[%s329 + $0x70] sm:$0xff]
        %v492 = vld [vmem:[%s329 + $0x78] sm:$0xff]
        %493 = vmatprep.subr.mxu0 0.0
        %494 = vmatpush1.msra.mxu0 %v477
        %495 = vmatprep.subr.mxu0 0.0
        %496 = vmatpush1.msra.mxu0 %v478
        %497 = vmatprep.subr.mxu0 0.0
        %498 = vmatpush1.msra.mxu0 %v479
        %499 = vmatprep.subr.mxu0 0.0
        %500 = vmatpush1.msra.mxu0 %v480
        %501 = vmatprep.subr.mxu0 0.0
        %502 = vmatpush1.msra.mxu0 %v481
        %503 = vmatprep.subr.mxu0 0.0
        %504 = vmatpush1.msra.mxu0 %v482
        %505 = vmatprep.subr.mxu0 0.0
        %506 = vmatpush1.msra.mxu0 %v483
        %507 = vmatprep.subr.mxu0 0.0
        %508 = vmatpush1.msra.mxu0 %v484
        %509 = vmatprep.subr.mxu0 0.0
        %510 = vmatpush1.msra.mxu0 %v485
        %511 = vmatprep.subr.mxu0 0.0
        %512 = vmatpush1.msra.mxu0 %v486
        %513 = vmatprep.subr.mxu0 0.0
        %514 = vmatpush1.msra.mxu0 %v487
        %515 = vmatprep.subr.mxu0 0.0
        %516 = vmatpush1.msra.mxu0 %v488
        %517 = vmatprep.subr.mxu0 0.0
        %518 = vmatpush1.msra.mxu0 %v489
        %519 = vmatprep.subr.mxu0 0.0
        %520 = vmatpush1.msra.mxu0 %v490
        %521 = vmatprep.subr.mxu0 0.0
        %522 = vmatpush1.msra.mxu0 %v491
        %523 = vmatprep.subr.mxu0 0.0
        %524 = vmatpush1.msra.mxu0 %v492
        %525 = vmatprep.subr.mxu0 0.0
        %526 = vmatpush1.msra.mxu0 0.0
        %527 = vmatprep.subr.mxu0 0.0
        %528 = vmatpush1.msra.mxu0 0.0
        %529 = vmatprep.subr.mxu0 0.0
        %530 = vmatpush1.msra.mxu0 0.0
        %531 = vmatprep.subr.mxu0 0.0
        %532 = vmatpush1.msra.mxu0 0.0
        %533 = vmatprep.subr.mxu0 0.0
        %534 = vmatpush1.msra.mxu0 0.0
        %535 = vmatprep.subr.mxu0 0.0
        %536 = vmatpush1.msra.mxu0 0.0
        %537 = vmatprep.subr.mxu0 0.0
        %538 = vmatpush1.msra.mxu0 0.0
        %539 = vmatprep.subr.mxu0 0.0
        %540 = vmatpush1.msra.mxu0 0.0
        %541 = vmatprep.subr.mxu0 0.0
        %542 = vmatpush1.msra.mxu0 0.0
        %543 = vmatprep.subr.mxu0 0.0
        %544 = vmatpush1.msra.mxu0 0.0
        %545 = vmatprep.subr.mxu0 0.0
        %546 = vmatpush1.msra.mxu0 0.0
        %547 = vmatprep.subr.mxu0 0.0
        %548 = vmatpush1.msra.mxu0 0.0
        %549 = vmatprep.subr.mxu0 0.0
        %550 = vmatpush1.msra.mxu0 0.0
        %551 = vmatprep.subr.mxu0 0.0
        %552 = vmatpush1.msra.mxu0 0.0
        %553 = vmatprep.subr.mxu0 0.0
        %554 = vmatpush1.msra.mxu0 0.0
        %555 = vmatprep.subr.mxu0 0.0
        %556 = vmatpush1.msra.mxu0 0.0
        %557 = vmatprep.mubr.f32.mxu0 0.0
        %558 = vmatmul.mubr.f32.gmra.mrb[0].mxu0 %v475
        %v559 = vpop.f32.mrb[0].mxu0
        %v560 = vadd.f32 0.0, %v559
        %v561 = vpop.f32.mrb[0].mxu0
        %562 = vdwg.mxu0
        %v563 = vadd.f32 %v476, %v560
        %564 = vst.msk [vmem:[#allocation2] sm:$0xff] %vm393, %v563
        %p565 = scmp.eq.s32.totalorder %s33, 1
        // Predicated region
        $region65: #{phi_mlp.1} parent=39 // pred_check
          %p566 = pneg %p565
        $region66: #{phi_mlp.1} parent=39 // pred_check_branch
          %568 = sbr.rel (%p566) target = $region68
        $region67: #{phi_mlp.1} parent=39 // pred_region
          %v569 = vld [vmem:[#allocation2] sm:$0xff]
          %v570 = vld [vmem:[#allocation11] sm:$0x1]
          %v572 = vlaneseq
          %v573 = vshrl.u32 %v572, 7
          %v574 = vsub.s32 0, %v573
          %v575 = vrot.slane %v570, %v574
          %v577 = vadd.f32 %v569, %v575
          %578 = vst.msk [vmem:[%s373] sm:$0xff] %vm393, %v577
        $region68: #{phi_mlp.1} parent=39 // pred_fallthru
          _
        %s579 = sand.u32 %s173, 1
        %s580 = scalar_lea.sflag [#allocation5], %s579
        %s581 = sand.u32 %s173, 1
        %s582 = smul.addr %s581, 8
        %s583 = scalar_lea.vmem [#allocation12], %s582
        // Predicated region
        $region69: #{phi_mlp.1} parent=39 // pred_check
          %p584 = pneg %p183
        $region70: #{phi_mlp.1} parent=39 // pred_check_branch
          %586 = sbr.rel (%p584) target = $region72
        $region71: #{phi_mlp.1} parent=39 // pred_region
          %s588 = ssub.s32 128, 128
          %589 = vsyncadd %s580, %s588
          %s590 = smul.addr %s32, 128
          %s591 = scalar_lea.hbm %s5, %s590
          %s593 = sshll.u32 %s583, 4
          %s594 = int_to_ptr.vmem [resolvable:$true] %s593
          %596 = dma.vmem_to_hbm [thread:$0]  %s594, 128, %s591, %s580
        $region72: #{phi_mlp.1} parent=39 // pred_fallthru
          _
      $region40: #{phi_mlp.1} parent=5 // pred_fallthru
        _
      %p597 = scmp.le.s32.totalorder 2, %s23
      // Predicated region
      $region73: #{phi_mlp.1} parent=5 // pred_check
        %p598 = pneg %p597
      $region74: #{phi_mlp.1} parent=5 // pred_check_branch
        %600 = sbr.rel (%p598) target = $region76
      $region75: #{phi_mlp.1} parent=5 // pred_region
        %s601 = ssub.s32 %s23, 2
        // Predicated region
        $region77: #{phi_mlp.1} parent=75 // pred_check
          %p602 = pneg %p189
        $region78: #{phi_mlp.1} parent=75 // pred_check_branch
          %604 = sbr.rel (%p602) target = $region80
        $region79: #{phi_mlp.1} parent=75 // pred_region
          %s605 = sand.u32 %s174, 1
          %s606 = scalar_lea.sflag [#allocation5], %s605
          %s607 = sand.u32 %s174, 1
          %s608 = smul.addr %s607, 8
          %s609 = scalar_lea.vmem [#allocation12], %s608
          %610 = dma.done %s606, 128
        $region80: #{phi_mlp.1} parent=75 // pred_fallthru
          _
      $region76: #{phi_mlp.1} parent=5 // pred_fallthru
        _
    $region6: #{phi_mlp.1} parent=1 // loop_footer
      %s27 = sadd.s32 1, %s23
    $region7: #{phi_mlp.1} parent=1 // loop_footer_branch
      %22 = sbr.rel target = $region3
    $region8: #{phi_mlp.1} parent=1 // loop_exit
      _
    %611 = vsyncpa [#allocation4], 1
    %s612 = scalar_lea.sflag [#allocation4], 1
    %613 = vsyncpa %s612, 1
    %614 = vsyncpa [#allocation7], 1
    %s615 = scalar_lea.sflag [#allocation7], 1
    %616 = vsyncpa %s615, 1
    %617 = vsyncpa [#allocation10], 1
    %s618 = scalar_lea.sflag [#allocation10], 1
    %619 = vsyncpa %s618, 1
    %620 = vsyncpa [#allocation5], 1
    %s621 = scalar_lea.sflag [#allocation5], 1
    %622 = vsyncpa %s621, 1

</llo_original>
